<compile_context>
chip_gen: v6e
topology: v6e:2x2x1
jax: 0.10.0
libtpu: 0.0.40
codegen_flags: <defaults>
</compile_context>

<pallas_src>
import jax
import jax.numpy as jnp
from jax.experimental import pallas as pl
from jax.experimental.pallas import tpu as pltpu


# ---------------------------------------------------------------------------
# Kernels
# ---------------------------------------------------------------------------
def _vmem_copy_kernel(x_ref, o_ref):
    # Pure pass-through tile copy (reference forward performs no computation).
    o_ref[...] = x_ref[...]


def _hbm_dma_copy_kernel(x_hbm, o_hbm, sem):
    # Direct HBM->HBM DMA: the DMA engine moves the bytes, the TensorCore
    # never touches them (no VMEM staging, no vreg load/store).
    cp = pltpu.make_async_copy(x_hbm, o_hbm, sem)
    cp.start()
    cp.wait()


# ---------------------------------------------------------------------------
# Tiling helpers (used only by the optional "vmem_copy" mode)
# ---------------------------------------------------------------------------
_LANE_CANDIDATES = (1024, 512, 256, 128)


def _sublane_multiple(itemsize: int) -> int:
    # Packed sublane granularity: f32 -> 8 rows/vreg, bf16 -> 16, int8/fp8 -> 32.
    return {4: 8, 2: 16, 1: 32}.get(itemsize, 8)


def _hw_budget():
    """(tile_byte_budget, vmem_limit_bytes): generation-aware with safe fallback."""
    tile_bytes = 4 * 1024 * 1024   # 2 in + 2 out bufs = 16 MiB, safe everywhere
    vmem_limit = 32 << 20          # <= physical VMEM on v5e / v6e / v7x
    try:
        info = pltpu.get_tpu_info()
        vmem_cap = int(getattr(info, "vmem_capacity_bytes", 0) or 0)
        if vmem_cap >= 96 * 1024 * 1024:
            # v5e / v6e class (128 MiB physical VMEM): bigger tiles amortize the
            # ~0.35 us/grid-step pipeline overhead and lengthen DMAs.
            tile_bytes = 8 * 1024 * 1024
            vmem_limit = 48 << 20
        elif vmem_cap > 0:
            # v7x class (64 MiB physical per TC): keep headroom.
            tile_bytes = 4 * 1024 * 1024
            vmem_limit = 40 << 20
    except Exception:
        pass  # conservative defaults above are valid on every generation
    return tile_bytes, vmem_limit


def _choose_lane_layout(total_elems: int, sub_mult: int):
    """Pick a lane-dense (rows, lane) view; None if 128 does not divide total."""
    lane = None
    for cand in _LANE_CANDIDATES:
        if total_elems % cand == 0 and (total_elems // cand) >= sub_mult:
            lane = cand
            break
    if lane is None:
        for cand in _LANE_CANDIDATES:
            if total_elems % cand == 0:
                lane = cand
                break
    if lane is None:
        return None
    return total_elems // lane, lane


def _row_tile(rows: int, lane: int, itemsize: int, sub_mult: int,
              tile_budget_bytes: int) -> int:
    """Byte-budgeted row tile, rounded to the dtype-dependent sublane multiple."""
    max_rows = max(sub_mult, tile_budget_bytes // max(1, lane * itemsize))
    rt = min(rows, max_rows)
    if rows < sub_mult:
        return rows  # tiny input: one full block (exempt from the (8,128) rule)
    rt = max(sub_mult, (rt // sub_mult) * sub_mult)
    # Keep a >=2-step grid for non-trivial tensors so v7x can shard the copy
    # across both TensorCores / DMA paths (harmless extra step on v5e/v6e).
    if rt >= rows and rows >= 2 * sub_mult and rows * lane * itemsize > (512 * 1024):
        rt = max(sub_mult, (((rows + 1) // 2) // sub_mult) * sub_mult)
    return rt


# ---------------------------------------------------------------------------
# Pallas copy paths (optional plumbing; default forward never launches these)
# ---------------------------------------------------------------------------
def _pallas_dma_copy(x: jax.Array) -> jax.Array:
    nbytes = int(x.size) * jnp.dtype(x.dtype).itemsize
    return pl.pallas_call(
        _hbm_dma_copy_kernel,
        out_shape=jax.ShapeDtypeStruct(x.shape, x.dtype),
        in_specs=[pl.BlockSpec(memory_space=pl.ANY)],
        out_specs=pl.BlockSpec(memory_space=pl.ANY),
        scratch_shapes=[pltpu.SemaphoreType.DMA],
        cost_estimate=pl.CostEstimate(
            flops=0, transcendentals=0, bytes_accessed=2 * nbytes),
    )(x)


def _pallas_vmem_copy(x: jax.Array) -> jax.Array:
    orig_shape = x.shape
    total = int(x.size)
    itemsize = jnp.dtype(x.dtype).itemsize
    sub_mult = _sublane_multiple(itemsize)
    tile_budget, vmem_limit = _hw_budget()
    cost = pl.CostEstimate(
        flops=0, transcendentals=0, bytes_accessed=2 * total * itemsize)

    layout = _choose_lane_layout(total, sub_mult)
    if layout is not None:
        rows, lane = layout  # lane-dense: lane % 128 == 0 -> unmasked vst
    else:
        # Fallback (total not divisible by 128): keep the full last dim
        # (block_shape == full array dim is always legal) and tile the rows,
        # instead of a single un-pipelined full-array block.
        lane = orig_shape[-1] if len(orig_shape) > 1 else total
        rows = total // lane

    row_tile = _row_tile(rows, lane, itemsize, sub_mult, tile_budget)
    x2d = x.reshape(rows, lane)
    grid = (pl.cdiv(rows, row_tile),)

    out2d = pl.pallas_call(
        _vmem_copy_kernel,
        out_shape=jax.ShapeDtypeStruct((rows, lane), x.dtype),
        grid=grid,
        in_specs=[pl.BlockSpec((row_tile, lane), lambda i: (i, 0))],
        out_specs=pl.BlockSpec((row_tile, lane), lambda i: (i, 0)),
        compiler_params=pltpu.CompilerParams(
            dimension_semantics=("parallel",),
            vmem_limit_bytes=vmem_limit,
        ),
        cost_estimate=cost,
    )(x2d)
    return out2d.reshape(orig_shape)


# ---------------------------------------------------------------------------
# Forward
# ---------------------------------------------------------------------------
def local_ssm_block_forward(x: jax.Array, *, copy_mode: str = "passthrough") -> jax.Array:
    """Forward for LocalSSMBlock (reference forward() is an identity stub).

    copy_mode:
      - "passthrough" (default): return x — zero HBM traffic (fastest).
      - "dma_copy":  single HBM->HBM DMA inside a Pallas kernel.
      - "vmem_copy": tiled, lane-dense, pipelined VMEM-staged Pallas copy.
    """
    if copy_mode == "passthrough":
        return x
    if copy_mode == "dma_copy":
        return _pallas_dma_copy(x)
    if copy_mode == "vmem_copy":
        return _pallas_vmem_copy(x)
    raise ValueError(f"unknown copy_mode: {copy_mode!r}")


class LocalSSMBlock:
    """JAX mirror of the PyTorch LocalSSMBlock (no parameters defined upstream)."""

    def __init__(self, dim, config):
        self.dim = dim
        self.config = config

    def __call__(self, x, copy_mode: str = "passthrough"):
        return local_ssm_block_forward(x, copy_mode=copy_mode)


if __name__ == "__main__":
    key = jax.random.PRNGKey(0)
    # Small NCHW input consistent with a vision-style block: B=2, C=4, 16x16.
    x = jax.random.normal(key, (2, 4, 16, 16), dtype=jnp.float32)

    block = LocalSSMBlock(dim=4, config={})

    # Default (recommended) path: pure pass-through, no kernel launch.
    y0 = jax.block_until_ready(block(x))
    assert y0.shape == x.shape and y0.dtype == x.dtype
    assert bool(jnp.all(y0 == x))

    # Pallas HBM->HBM DMA copy path (no VMEM staging).
    y1 = jax.block_until_ready(block(x, copy_mode="dma_copy"))
    assert y1.shape == x.shape and y1.dtype == x.dtype
    assert bool(jnp.all(y1 == x))

    # Pallas tiled, lane-dense VMEM copy path.
    y2 = jax.block_until_ready(block(x, copy_mode="vmem_copy"))
    assert y2.shape == x.shape and y2.dtype == x.dtype
    assert bool(jnp.all(y2 == x))

    # Fallback path (element count not divisible by 128) — now row-tiled.
    x_odd = jax.random.normal(jax.random.PRNGKey(1), (2, 3, 5, 6), dtype=jnp.float32)
    y3 = jax.block_until_ready(local_ssm_block_forward(x_odd, copy_mode="vmem_copy"))
    assert y3.shape == x_odd.shape and y3.dtype == x_odd.dtype
    assert bool(jnp.all(y3 == x_odd))

    print("KERNEL_OK")
</pallas_src>

<mosaic_0001>
module attributes {stable_mosaic.version = 11 : i64} {
  func.func @_hbm_dma_copy_kernel(%arg0: memref<2x4x16x16xf32, #tpu.memory_space<any>>, %arg1: memref<2x4x16x16xf32, #tpu.memory_space<any>>, %arg2: memref<!tpu.dma_semaphore, #tpu.memory_space<semaphore_mem>>) attributes {dimension_semantics = [], scalar_prefetch = 0 : i64, scratch_operands = 1 : i64, tpu.core_type = #tpu.core_type<tc>} {
    tpu.enqueue_dma source(%arg0 : memref<2x4x16x16xf32, #tpu.memory_space<any>>) target(%arg1 : memref<2x4x16x16xf32, #tpu.memory_space<any>>) target_semaphore(%arg2 : memref<!tpu.dma_semaphore, #tpu.memory_space<semaphore_mem>>)
    tpu.wait_dma2 semaphore(%arg2 : memref<!tpu.dma_semaphore, #tpu.memory_space<semaphore_mem>>) src(%arg0 : memref<2x4x16x16xf32, #tpu.memory_space<any>>) dst(%arg1 : memref<2x4x16x16xf32, #tpu.memory_space<any>>)
    return
  }
}

</mosaic_0001>

<llo_original>
// kernel: tpu_custom_call.1
$region0: #{tpu_custom_call.1}
  #allocation0 [shape = 'u32[]', space=smem, size = 0x4, offset = 0x4, fixed_abs, tag = 'smem constant byte address 0x4 - core index']
  #allocation1 [shape = 'u32[144,128]{1,0:T(1,128)}', space=vmem, size = 0x12000, scoped, tag = 'internal scratch']
  #allocation2 [shape = 's32[1]{0}', space=sflag, size = 0x4, scoped, tag = 'scratch operand']
  #allocation3 [shape = 's32[]', space=sflag, size = 0x4, offset = 0, fixed_abs, tag = 'sflag constant byte address 0x0 - dummy sync flag']
  #allocation4 [shape = 'u32[0]{0}', space=smem, size = 0, offset = 0, fixed_abs, tag = 'smem constant byte address 0x0 - null']
  %s0 = inlined_call_operand.hbm [shape: f32[2,4,16,16], index: 0, kind: input, shape index: {}]
  %s1 = inlined_call_operand.hbm [shape: f32[2,4,16,16], index: 1, kind: output, shape index: {}]
  %s2 = sld [smem:[#allocation0]]
  $region2: #{tpu_custom_call.1} parent=0
    _
  %s4 = ssub.s32 1, %s2
  %s5 = scalar_select 0, %s4, %s2
  %s7 = sshll.u32 1, 14
  %s8 = sxor.u32 4294967295, %s7
  %12 = dma.general %s0, 2048, %s1, [#allocation2], 131072, [#allocation4], 0, 0
  %s13 = smul.u32 2, 4
  %s14 = smul.u32 %s13, 16
  %s15 = smul.u32 %s14, 1
  %s16 = sshll.u32 %s15, 4
  %17 = dma.done [#allocation2], %s16
  %18 = vsyncmov [#allocation2]
  %s19 = vpop.sfrf %18
  %p20 = scmp.eq.s32.totalorder %s19, 0
  %p21 = pneg %p20
  %23 = shalt.err (%p21)

</llo_original>
